<compile_context>
chip_gen: v7x
topology: tpu7x:2x2x1
jax: 0.10.0
libtpu: 0.0.40
codegen_flags: <defaults>
</compile_context>

<pallas_src>
import functools

import jax
import jax.numpy as jnp
from jax.experimental import pallas as pl
from jax.experimental.pallas import tpu as pltpu

HID1 = 64       # fc1 output width
HID2 = 32       # ad1 / va1 output width
HID_PAD = 128   # lane-padded width used for every hidden / output tile


def _round_up(x, m):
    return (x + m - 1) // m * m


def qnetwork_kernel(x_ref, w_ref, b_ref, out_ref, *, s_pad, action_size):
    """Fused dueling Q-net forward on one (TB, s_pad) batch tile.

    w_ref : (3, KMAX, 128) packed weight slab
        [0] fc1                  : rows 0:state_size, cols 0:64
        [1] [ad1 | va1]          : rows 0:64,         cols 0:32 | 32:64
        [2] blockdiag(ad2, va2)  : rows 0:32 cols 0:A ; rows 32:64 col A
    b_ref : (3, 1, 128) packed bias slab (matching column layout, zero-padded)
    """
    x = x_ref[...]                                                  # (TB, s_pad)

    # fc1 + ReLU -> (TB, 128); columns 64:128 are exactly 0 (zero weights/bias).
    h = jnp.dot(x, w_ref[0, :s_pad, :],
                preferred_element_type=jnp.float32) + b_ref[0]
    h = jnp.maximum(h, 0.0)

    # Fused [ad1 | va1] + ReLU -> (TB, 128); cols 0:32 = a1, 32:64 = v1, rest 0.
    g = jnp.dot(h, w_ref[1],
                preferred_element_type=jnp.float32) + b_ref[1]
    g = jnp.maximum(g, 0.0)

    # Fused block-diagonal [ad2 ; va2] -> (TB, 128); cols 0:A = advantage, col A = value.
    z = jnp.dot(g, w_ref[2],
                preferred_element_type=jnp.float32) + b_ref[2]

    adv = z[:, :action_size]                                        # (TB, A)  static slice
    val = z[:, action_size:action_size + 1]                         # (TB, 1)
    max_adv = jnp.max(adv, axis=1, keepdims=True)                   # (TB, 1)

    # Lane-dense (TB, 128) store; only cols 0:A are meaningful (wrapper slices them).
    out_ref[...] = val + z - max_adv


def pack_params(params, state_size, action_size):
    """Pack the 10 PyTorch-layout tensors into one weight slab and one bias slab."""
    (w1, b1, wa1, ba1, wa2, ba2, wv1, bv1, wv2, bv2) = params
    s_pad = _round_up(state_size, 8)
    kmax = max(HID_PAD, s_pad)

    wslab = jnp.zeros((3, kmax, HID_PAD), jnp.float32)
    wslab = wslab.at[0, :state_size, :HID1].set(w1)
    wslab = wslab.at[1, :HID1, :HID2].set(wa1)
    wslab = wslab.at[1, :HID1, HID2:2 * HID2].set(wv1)
    wslab = wslab.at[2, :HID2, :action_size].set(wa2)
    wslab = wslab.at[2, HID2:2 * HID2, action_size:action_size + 1].set(wv2)

    bslab = jnp.zeros((3, 1, HID_PAD), jnp.float32)
    bslab = bslab.at[0, 0, :HID1].set(b1[0])
    bslab = bslab.at[1, 0, :HID2].set(ba1[0])
    bslab = bslab.at[1, 0, HID2:2 * HID2].set(bv1[0])
    bslab = bslab.at[2, 0, :action_size].set(ba2[0])
    bslab = bslab.at[2, 0, action_size].set(bv2[0, 0])
    return wslab, bslab, s_pad


def qnetwork_forward(state, wslab, bslab, *, state_size, action_size, s_pad,
                     block_b=512):
    """state: (B, state_size) f32 -> (B, action_size) f32."""
    B = state.shape[0]

    # Batch tile: multiple of 8, <= block_b (well under VMEM on v5e/v6e/v7x).
    tb = min(block_b, _round_up(B, 8))
    b_pad = _round_up(B, tb)

    col_pad = s_pad - state_size
    row_pad = b_pad - B
    if col_pad or row_pad:
        state = jnp.pad(state, ((0, row_pad), (0, col_pad)))

    kernel = functools.partial(qnetwork_kernel, s_pad=s_pad,
                               action_size=action_size)

    out = pl.pallas_call(
        kernel,
        out_shape=jax.ShapeDtypeStruct((b_pad, HID_PAD), jnp.float32),
        grid=(b_pad // tb,),
        in_specs=[
            pl.BlockSpec((tb, s_pad), lambda i: (i, 0)),       # batch tile of state
            pl.BlockSpec(wslab.shape, lambda i: (0, 0, 0)),    # VMEM-resident weights
            pl.BlockSpec(bslab.shape, lambda i: (0, 0, 0)),    # VMEM-resident biases
        ],
        out_specs=pl.BlockSpec((tb, HID_PAD), lambda i: (i, 0)),
        compiler_params=pltpu.CompilerParams(
            dimension_semantics=("parallel",)),
    )(state, wslab, bslab)

    return out[:B, :action_size]


def init_linear(key, in_features, out_features):
    """Deterministic init mimicking PyTorch nn.Linear default (uniform +/- 1/sqrt(in)).

    W is returned as (in_features, out_features) (already transposed), b as (1, out).
    """
    kw, kb = jax.random.split(key)
    bound = 1.0 / jnp.sqrt(jnp.float32(in_features))
    w = jax.random.uniform(kw, (in_features, out_features), jnp.float32, -bound, bound)
    b = jax.random.uniform(kb, (1, out_features), jnp.float32, -bound, bound)
    return w, b


def make_params(key, state_size, action_size):
    k1, k2, k3, k4, k5 = jax.random.split(key, 5)
    w1, b1 = init_linear(k1, state_size, 64)      # fc1
    wa1, ba1 = init_linear(k2, 64, 32)            # ad1
    wa2, ba2 = init_linear(k3, 32, action_size)   # ad2
    wv1, bv1 = init_linear(k4, 64, 32)            # va1
    wv2, bv2 = init_linear(k5, 32, 1)             # va2
    return (w1, b1, wa1, ba1, wa2, ba2, wv1, bv1, wv2, bv2)


def qnetwork_reference(state, params):
    """Pure-JAX reference (unfused, mirrors the PyTorch module exactly)."""
    (w1, b1, wa1, ba1, wa2, ba2, wv1, bv1, wv2, bv2) = params
    h = jnp.maximum(state @ w1 + b1, 0.0)
    a1 = jnp.maximum(h @ wa1 + ba1, 0.0)
    adv = a1 @ wa2 + ba2
    v1 = jnp.maximum(h @ wv1 + bv1, 0.0)
    val = v1 @ wv2 + bv2
    return val + adv - jnp.max(adv, axis=1, keepdims=True)


if __name__ == "__main__":
    state_size = 16
    action_size = 4
    batch = 8

    key = jax.random.PRNGKey(0)
    k_params, k_state = jax.random.split(key)

    params = make_params(k_params, state_size, action_size)
    state = jax.random.normal(k_state, (batch, state_size), jnp.float32)

    wslab, bslab, s_pad = pack_params(params, state_size, action_size)
    out = qnetwork_forward(state, wslab, bslab, state_size=state_size,
                           action_size=action_size, s_pad=s_pad)
    out = jax.block_until_ready(out)

    ref = qnetwork_reference(state, params)
    assert out.shape == (batch, action_size)
    assert jnp.allclose(out, ref, atol=1e-5, rtol=1e-5)

    print("KERNEL_OK")
</pallas_src>

<mosaic_0001>
module attributes {stable_mosaic.version = 11 : i64} {
  func.func @qnetwork_kernel(%arg0: i32, %arg1: memref<8x16xf32, #tpu.memory_space<vmem>>, %arg2: memref<3x128x128xf32, #tpu.memory_space<vmem>>, %arg3: memref<3x1x128xf32, #tpu.memory_space<vmem>>, %arg4: memref<8x128xf32, #tpu.memory_space<vmem>>) attributes {dimension_semantics = [#tpu.dimension_semantics<parallel>], iteration_bounds = array<i64: 1>, scalar_prefetch = 0 : i64, scratch_operands = 0 : i64, tpu.core_type = #tpu.core_type<tc>, window_params = [{transform_indices = @transform_0, window_bounds = array<i64: 8, 16>}, {pipeline_mode = #tpu.pipeline_mode<synchronous>, transform_indices = @transform_1, window_bounds = array<i64: 3, 128, 128>}, {pipeline_mode = #tpu.pipeline_mode<synchronous>, transform_indices = @transform_2, window_bounds = array<i64: 3, 1, 128>}, {transform_indices = @transform_3, window_bounds = array<i64: 8, 128>}]} {
    %c0 = arith.constant 0 : index
    %c0_0 = arith.constant 0 : index
    %0 = vector.load %arg1[%c0, %c0_0] : memref<8x16xf32, #tpu.memory_space<vmem>>, vector<8x16xf32>
    %c0_1 = arith.constant 0 : index
    %c0_2 = arith.constant 0 : index
    %c0_3 = arith.constant 0 : index
    %1 = vector.load %arg2[%c0_1, %c0_2, %c0_3] : memref<3x128x128xf32, #tpu.memory_space<vmem>>, vector<1x16x128xf32>
    %2 = vector.shape_cast %1 : vector<1x16x128xf32> to vector<16x128xf32>
    %cst = arith.constant dense<0.000000e+00> : vector<8x128xf32>
    %3 = tpu.matmul %0, %2, %cst {dimension_numbers = #tpu.dot_dimension_numbers<[1], [0], [0], [1], [0, 0, 1, 1], [], []>} : vector<8x16xf32>, vector<16x128xf32>, vector<8x128xf32> -> vector<8x128xf32>
    %c0_4 = arith.constant 0 : index
    %c0_5 = arith.constant 0 : index
    %c0_6 = arith.constant 0 : index
    %4 = vector.load %arg3[%c0_4, %c0_5, %c0_6] : memref<3x1x128xf32, #tpu.memory_space<vmem>>, vector<1x1x128xf32>
    %5 = vector.shape_cast %4 : vector<1x1x128xf32> to vector<1x128xf32>
    %6 = vector.broadcast %5 : vector<1x128xf32> to vector<8x128xf32>
    %7 = arith.addf %3, %6 : vector<8x128xf32>
    %cst_7 = arith.constant 0.000000e+00 : f32
    %8 = vector.broadcast %cst_7 : f32 to vector<8x128xf32>
    %9 = arith.maximumf %7, %8 : vector<8x128xf32>
    %c1 = arith.constant 1 : index
    %c0_8 = arith.constant 0 : index
    %c0_9 = arith.constant 0 : index
    %10 = vector.load %arg2[%c1, %c0_8, %c0_9] : memref<3x128x128xf32, #tpu.memory_space<vmem>>, vector<1x128x128xf32>
    %11 = vector.shape_cast %10 : vector<1x128x128xf32> to vector<128x128xf32>
    %cst_10 = arith.constant dense<0.000000e+00> : vector<8x128xf32>
    %12 = tpu.matmul %9, %11, %cst_10 {dimension_numbers = #tpu.dot_dimension_numbers<[1], [0], [0], [1], [0, 0, 1, 1], [], []>} : vector<8x128xf32>, vector<128x128xf32>, vector<8x128xf32> -> vector<8x128xf32>
    %c1_11 = arith.constant 1 : index
    %c0_12 = arith.constant 0 : index
    %c0_13 = arith.constant 0 : index
    %13 = vector.load %arg3[%c1_11, %c0_12, %c0_13] : memref<3x1x128xf32, #tpu.memory_space<vmem>>, vector<1x1x128xf32>
    %14 = vector.shape_cast %13 : vector<1x1x128xf32> to vector<1x128xf32>
    %15 = vector.broadcast %14 : vector<1x128xf32> to vector<8x128xf32>
    %16 = arith.addf %12, %15 : vector<8x128xf32>
    %cst_14 = arith.constant 0.000000e+00 : f32
    %17 = vector.broadcast %cst_14 : f32 to vector<8x128xf32>
    %18 = arith.maximumf %16, %17 : vector<8x128xf32>
    %c2 = arith.constant 2 : index
    %c0_15 = arith.constant 0 : index
    %c0_16 = arith.constant 0 : index
    %19 = vector.load %arg2[%c2, %c0_15, %c0_16] : memref<3x128x128xf32, #tpu.memory_space<vmem>>, vector<1x128x128xf32>
    %20 = vector.shape_cast %19 : vector<1x128x128xf32> to vector<128x128xf32>
    %cst_17 = arith.constant dense<0.000000e+00> : vector<8x128xf32>
    %21 = tpu.matmul %18, %20, %cst_17 {dimension_numbers = #tpu.dot_dimension_numbers<[1], [0], [0], [1], [0, 0, 1, 1], [], []>} : vector<8x128xf32>, vector<128x128xf32>, vector<8x128xf32> -> vector<8x128xf32>
    %c2_18 = arith.constant 2 : index
    %c0_19 = arith.constant 0 : index
    %c0_20 = arith.constant 0 : index
    %22 = vector.load %arg3[%c2_18, %c0_19, %c0_20] : memref<3x1x128xf32, #tpu.memory_space<vmem>>, vector<1x1x128xf32>
    %23 = vector.shape_cast %22 : vector<1x1x128xf32> to vector<1x128xf32>
    %24 = vector.broadcast %23 : vector<1x128xf32> to vector<8x128xf32>
    %25 = arith.addf %21, %24 : vector<8x128xf32>
    %26 = vector.extract_strided_slice %25 {offsets = [0, 0], sizes = [8, 4], strides = [1, 1]} : vector<8x128xf32> to vector<8x4xf32>
    %27 = vector.extract_strided_slice %25 {offsets = [0, 4], sizes = [8, 1], strides = [1, 1]} : vector<8x128xf32> to vector<8x1xf32>
    %cst_21 = arith.constant dense<0xFF800000> : vector<8xf32>
    %28 = vector.multi_reduction <maximumf>, %26, %cst_21 [1] : vector<8x4xf32> to vector<8xf32>
    %29 = vector.shape_cast %28 : vector<8xf32> to vector<8x1xf32>
    %30 = vector.broadcast %27 : vector<8x1xf32> to vector<8x128xf32>
    %31 = arith.addf %30, %25 : vector<8x128xf32>
    %32 = vector.broadcast %29 : vector<8x1xf32> to vector<8x128xf32>
    %33 = arith.subf %31, %32 : vector<8x128xf32>
    %c0_22 = arith.constant 0 : index
    %c0_23 = arith.constant 0 : index
    %34 = vector.load %arg4[%c0_22, %c0_23] : memref<8x128xf32, #tpu.memory_space<vmem>>, vector<8x128xf32>
    tpu.vector_store %arg4[%c0_22, %c0_23], %33 {strides = array<i32>} : memref<8x128xf32, #tpu.memory_space<vmem>>, vector<8x128xf32>,
    return
  }
  func.func @transform_0(%arg0: i32) -> (i32, i32) {
    %c0_i32 = arith.constant 0 : i32
    %c0_i32_0 = arith.constant 0 : i32
    return %arg0, %c0_i32 : i32, i32
  }
  func.func @transform_1(%arg0: i32) -> (i32, i32, i32) {
    %c0_i32 = arith.constant 0 : i32
    %c0_i32_0 = arith.constant 0 : i32
    %c0_i32_1 = arith.constant 0 : i32
    %c0_i32_2 = arith.constant 0 : i32
    return %c0_i32, %c0_i32_0, %c0_i32_1 : i32, i32, i32
  }
  func.func @transform_2(%arg0: i32) -> (i32, i32, i32) {
    %c0_i32 = arith.constant 0 : i32
    %c0_i32_0 = arith.constant 0 : i32
    %c0_i32_1 = arith.constant 0 : i32
    %c0_i32_2 = arith.constant 0 : i32
    return %c0_i32, %c0_i32_0, %c0_i32_1 : i32, i32, i32
  }
  func.func @transform_3(%arg0: i32) -> (i32, i32) {
    %c0_i32 = arith.constant 0 : i32
    %c0_i32_0 = arith.constant 0 : i32
    return %arg0, %c0_i32 : i32, i32
  }
}

</mosaic_0001>

<llo_original>
// kernel: tpu_custom_call.1
$region0: #{tpu_custom_call.1}
  #allocation0 [shape = 'u32[]', space=smem, size = 0x4, offset = 0x4, fixed_abs, tag = 'smem constant byte address 0x4 - core index']
  #allocation1 [shape = 'u32[144,128]{1,0:T(1,128)}', space=vmem, size = 0x12000, scoped, tag = 'internal scratch']
  %s0 = inlined_call_operand.hbm [shape: f32[8,16], index: 0, kind: input, shape index: {}]
  %s1 = inlined_call_operand.hbm [shape: f32[3,128,128], index: 1, kind: input, shape index: {}]
  %s2 = inlined_call_operand.vmem [shape: f32[3,1,128], index: 2, kind: input, shape index: {}]
  %s3 = inlined_call_operand.hbm [shape: f32[8,128], index: 3, kind: output, shape index: {}]
  %s4 = sld [smem:[#allocation0]]
  $region30: #{tpu_custom_call.1} parent=0
    _
  %s6 = ssub.s32 1, %s4
  %s7 = scalar_select 0, %s6, %s4
  $region1: #{tpu_custom_call.1} parent=0
    #allocation2 [shape = 'u8[4096]{0}', space=vmem, size = 0x1000, scoped, tag = 'input window, operand 0, single buffered']
    #allocation3 [shape = 's32[1]{0}', space=sflag, size = 0x4, scoped, tag = 'scoped memory for tpu_custom_call.1']
    #allocation4 [shape = 's32[1]{0}', space=sflag, size = 0x4, scoped, tag = 'scoped memory for tpu_custom_call.1']
    #allocation5 [shape = 'u8[196608]{0}', space=vmem, size = 0x30000, scoped, tag = 'input window, operand 1, single buffered']
    #allocation6 [shape = 's32[1]{0}', space=sflag, size = 0x4, scoped, tag = 'scoped memory for tpu_custom_call.1']
    #allocation7 [shape = 'u8[4096]{0}', space=vmem, size = 0x1000, scoped, tag = 'output window, operand 0, single buffered']
    %8 = vsyncpa [#allocation3], 0
    %9 = vsyncpa [#allocation6], 0
    %10 = vsyncpa [#allocation4], 0
    // Predicated region
    $region2: #{tpu_custom_call.1} parent=1 // pred_check
      _
    $region3: #{tpu_custom_call.1} parent=1 // pred_check_branch
      %12 = sbr.rel (0) target = $region5
    $region4: #{tpu_custom_call.1} parent=1 // pred_region
      %s14 = ssub.s32 128, 128
      %15 = vsyncadd [#allocation3], %s14
      %s17 = sshll.u32 [#allocation2], 4
      %s18 = int_to_ptr.vmem [resolvable:$true] %s17
      %20 = dma.hbm_to_vmem [thread:$0]  %s0, 128, %s18, [#allocation3]
    $region5: #{tpu_custom_call.1} parent=1 // pred_fallthru
      _
    // Predicated region
    $region6: #{tpu_custom_call.1} parent=1 // pred_check
      _
    $region7: #{tpu_custom_call.1} parent=1 // pred_check_branch
      %22 = sbr.rel (0) target = $region9
    $region8: #{tpu_custom_call.1} parent=1 // pred_region
      %s24 = ssub.s32 6144, 6144
      %25 = vsyncadd [#allocation6], %s24
      %s26 = sshll.u32 [#allocation5], 4
      %s27 = int_to_ptr.vmem [resolvable:$true] %s26
      %32 = dma.hbm_to_vmem [thread:$0]  %s1, 6144, %s27, [#allocation6], 128, 128, 8
    $region9: #{tpu_custom_call.1} parent=1 // pred_fallthru
      _
    // Predicated region
    $region10: #{tpu_custom_call.1} parent=1 // pred_check
      _
    $region11: #{tpu_custom_call.1} parent=1 // pred_check_branch
      %34 = sbr.rel (0) target = $region13
    $region12: #{tpu_custom_call.1} parent=1 // pred_region
      _
    $region13: #{tpu_custom_call.1} parent=1 // pred_fallthru
      _
    // Predicated region
    $region14: #{tpu_custom_call.1} parent=1 // pred_check
      _
    $region15: #{tpu_custom_call.1} parent=1 // pred_check_branch
      %36 = sbr.rel (0) target = $region17
    $region16: #{tpu_custom_call.1} parent=1 // pred_region
      %37 = dma.done [#allocation3], 128
    $region17: #{tpu_custom_call.1} parent=1 // pred_fallthru
      _
    // Predicated region
    $region18: #{tpu_custom_call.1} parent=1 // pred_check
      _
    $region19: #{tpu_custom_call.1} parent=1 // pred_check_branch
      %39 = sbr.rel (0) target = $region21
    $region20: #{tpu_custom_call.1} parent=1 // pred_region
      %40 = dma.done [#allocation6], 6144
    $region21: #{tpu_custom_call.1} parent=1 // pred_fallthru
      _
    %v41 = vld [vmem:[#allocation2] sm:$0xff]
    %v42 = vld [vmem:[#allocation5] sm:$0xff]
    %v43 = vld [vmem:[#allocation5 + $0x8] sm:$0xff]
    %v44 = vld [vmem:[%s2] sm:$0x1]
    %v46 = vlaneseq
    %v47 = vshrl.u32 %v46, 7
    %v48 = vsub.s32 0, %v47
    %v49 = vrot.slane %v44, %v48
    %vm51 = vcmask 130048
    %v53 = vsel %vm51, %v41, 0
    %55 = vmatprep.subr.mxu0 0.0
    %56 = vmatpush1.msra.mxu0 %v42
    %57 = vmatprep.subr.mxu0 0.0
    %58 = vmatpush1.msra.mxu0 %v43
    %59 = vmatprep.subr.mxu0 0.0
    %60 = vmatpush1.msra.mxu0 0.0
    %61 = vmatprep.subr.mxu0 0.0
    %62 = vmatpush1.msra.mxu0 0.0
    %63 = vmatprep.subr.mxu0 0.0
    %64 = vmatpush1.msra.mxu0 0.0
    %65 = vmatprep.subr.mxu0 0.0
    %66 = vmatpush1.msra.mxu0 0.0
    %67 = vmatprep.subr.mxu0 0.0
    %68 = vmatpush1.msra.mxu0 0.0
    %69 = vmatprep.subr.mxu0 0.0
    %70 = vmatpush1.msra.mxu0 0.0
    %71 = vmatprep.subr.mxu0 0.0
    %72 = vmatpush1.msra.mxu0 0.0
    %73 = vmatprep.subr.mxu0 0.0
    %74 = vmatpush1.msra.mxu0 0.0
    %75 = vmatprep.subr.mxu0 0.0
    %76 = vmatpush1.msra.mxu0 0.0
    %77 = vmatprep.subr.mxu0 0.0
    %78 = vmatpush1.msra.mxu0 0.0
    %79 = vmatprep.subr.mxu0 0.0
    %80 = vmatpush1.msra.mxu0 0.0
    %81 = vmatprep.subr.mxu0 0.0
    %82 = vmatpush1.msra.mxu0 0.0
    %83 = vmatprep.subr.mxu0 0.0
    %84 = vmatpush1.msra.mxu0 0.0
    %85 = vmatprep.subr.mxu0 0.0
    %86 = vmatpush1.msra.mxu0 0.0
    %87 = vmatprep.subr.mxu0 0.0
    %88 = vmatpush1.msra.mxu0 0.0
    %89 = vmatprep.subr.mxu0 0.0
    %90 = vmatpush1.msra.mxu0 0.0
    %91 = vmatprep.subr.mxu0 0.0
    %92 = vmatpush1.msra.mxu0 0.0
    %93 = vmatprep.subr.mxu0 0.0
    %94 = vmatpush1.msra.mxu0 0.0
    %95 = vmatprep.subr.mxu0 0.0
    %96 = vmatpush1.msra.mxu0 0.0
    %97 = vmatprep.subr.mxu0 0.0
    %98 = vmatpush1.msra.mxu0 0.0
    %99 = vmatprep.subr.mxu0 0.0
    %100 = vmatpush1.msra.mxu0 0.0
    %101 = vmatprep.subr.mxu0 0.0
    %102 = vmatpush1.msra.mxu0 0.0
    %103 = vmatprep.subr.mxu0 0.0
    %104 = vmatpush1.msra.mxu0 0.0
    %105 = vmatprep.subr.mxu0 0.0
    %106 = vmatpush1.msra.mxu0 0.0
    %107 = vmatprep.subr.mxu0 0.0
    %108 = vmatpush1.msra.mxu0 0.0
    %109 = vmatprep.subr.mxu0 0.0
    %110 = vmatpush1.msra.mxu0 0.0
    %111 = vmatprep.subr.mxu0 0.0
    %112 = vmatpush1.msra.mxu0 0.0
    %113 = vmatprep.subr.mxu0 0.0
    %114 = vmatpush1.msra.mxu0 0.0
    %115 = vmatprep.subr.mxu0 0.0
    %116 = vmatpush1.msra.mxu0 0.0
    %117 = vmatprep.subr.mxu0 0.0
    %118 = vmatpush1.msra.mxu0 0.0
    %119 = vmatprep.mubr.f32.mxu0 0.0
    %120 = vmatmul.mubr.f32.gmra.mrb[0].mxu0 %v53
    %v121 = vpop.f32.mrb[0].mxu0
    %v122 = vadd.f32 %v49, %v121
    %v123 = vpop.f32.mrb[0].mxu0
    %124 = vdwg.mxu0
    %v125 = vmax.f32 %v122, 0.0
    %s126 = scalar_lea.vmem [#allocation5], 128
    %v127 = vld [vmem:[%s126] sm:$0xff]
    %v128 = vld [vmem:[%s126 + $0x8] sm:$0xff]
    %v129 = vld [vmem:[%s126 + $0x10] sm:$0xff]
    %v130 = vld [vmem:[%s126 + $0x18] sm:$0xff]
    %v131 = vld [vmem:[%s126 + $0x20] sm:$0xff]
    %v132 = vld [vmem:[%s126 + $0x28] sm:$0xff]
    %v133 = vld [vmem:[%s126 + $0x30] sm:$0xff]
    %v134 = vld [vmem:[%s126 + $0x38] sm:$0xff]
    %v135 = vld [vmem:[%s126 + $0x40] sm:$0xff]
    %v136 = vld [vmem:[%s126 + $0x48] sm:$0xff]
    %v137 = vld [vmem:[%s126 + $0x50] sm:$0xff]
    %v138 = vld [vmem:[%s126 + $0x58] sm:$0xff]
    %v139 = vld [vmem:[%s126 + $0x60] sm:$0xff]
    %v140 = vld [vmem:[%s126 + $0x68] sm:$0xff]
    %v141 = vld [vmem:[%s126 + $0x70] sm:$0xff]
    %v142 = vld [vmem:[%s126 + $0x78] sm:$0xff]
    %s143 = scalar_lea.vmem %s2, 1
    %v144 = vld [vmem:[%s143] sm:$0x1]
    %v146 = vlaneseq
    %v147 = vshrl.u32 %v146, 7
    %v148 = vsub.s32 0, %v147
    %v149 = vrot.slane %v144, %v148
    %151 = vmatprep.subr.mxu0 0.0
    %152 = vmatpush1.msra.mxu0 %v127
    %153 = vmatprep.subr.mxu0 0.0
    %154 = vmatpush1.msra.mxu0 %v128
    %155 = vmatprep.subr.mxu0 0.0
    %156 = vmatpush1.msra.mxu0 %v129
    %157 = vmatprep.subr.mxu0 0.0
    %158 = vmatpush1.msra.mxu0 %v130
    %159 = vmatprep.subr.mxu0 0.0
    %160 = vmatpush1.msra.mxu0 %v131
    %161 = vmatprep.subr.mxu0 0.0
    %162 = vmatpush1.msra.mxu0 %v132
    %163 = vmatprep.subr.mxu0 0.0
    %164 = vmatpush1.msra.mxu0 %v133
    %165 = vmatprep.subr.mxu0 0.0
    %166 = vmatpush1.msra.mxu0 %v134
    %167 = vmatprep.subr.mxu0 0.0
    %168 = vmatpush1.msra.mxu0 %v135
    %169 = vmatprep.subr.mxu0 0.0
    %170 = vmatpush1.msra.mxu0 %v136
    %171 = vmatprep.subr.mxu0 0.0
    %172 = vmatpush1.msra.mxu0 %v137
    %173 = vmatprep.subr.mxu0 0.0
    %174 = vmatpush1.msra.mxu0 %v138
    %175 = vmatprep.subr.mxu0 0.0
    %176 = vmatpush1.msra.mxu0 %v139
    %177 = vmatprep.subr.mxu0 0.0
    %178 = vmatpush1.msra.mxu0 %v140
    %179 = vmatprep.subr.mxu0 0.0
    %180 = vmatpush1.msra.mxu0 %v141
    %181 = vmatprep.subr.mxu0 0.0
    %182 = vmatpush1.msra.mxu0 %v142
    %183 = vmatprep.subr.mxu0 0.0
    %184 = vmatpush1.msra.mxu0 0.0
    %185 = vmatprep.subr.mxu0 0.0
    %186 = vmatpush1.msra.mxu0 0.0
    %187 = vmatprep.subr.mxu0 0.0
    %188 = vmatpush1.msra.mxu0 0.0
    %189 = vmatprep.subr.mxu0 0.0
    %190 = vmatpush1.msra.mxu0 0.0
    %191 = vmatprep.subr.mxu0 0.0
    %192 = vmatpush1.msra.mxu0 0.0
    %193 = vmatprep.subr.mxu0 0.0
    %194 = vmatpush1.msra.mxu0 0.0
    %195 = vmatprep.subr.mxu0 0.0
    %196 = vmatpush1.msra.mxu0 0.0
    %197 = vmatprep.subr.mxu0 0.0
    %198 = vmatpush1.msra.mxu0 0.0
    %199 = vmatprep.subr.mxu0 0.0
    %200 = vmatpush1.msra.mxu0 0.0
    %201 = vmatprep.subr.mxu0 0.0
    %202 = vmatpush1.msra.mxu0 0.0
    %203 = vmatprep.subr.mxu0 0.0
    %204 = vmatpush1.msra.mxu0 0.0
    %205 = vmatprep.subr.mxu0 0.0
    %206 = vmatpush1.msra.mxu0 0.0
    %207 = vmatprep.subr.mxu0 0.0
    %208 = vmatpush1.msra.mxu0 0.0
    %209 = vmatprep.subr.mxu0 0.0
    %210 = vmatpush1.msra.mxu0 0.0
    %211 = vmatprep.subr.mxu0 0.0
    %212 = vmatpush1.msra.mxu0 0.0
    %213 = vmatprep.subr.mxu0 0.0
    %214 = vmatpush1.msra.mxu0 0.0
    %215 = vmatprep.mubr.f32.mxu0 0.0
    %216 = vmatmul.mubr.f32.gmra.mrb[0].mxu0 %v125
    %v217 = vpop.f32.mrb[0].mxu0
    %v218 = vadd.f32 %v149, %v217
    %v219 = vpop.f32.mrb[0].mxu0
    %220 = vdwg.mxu0
    %v221 = vmax.f32 %v218, 0.0
    %s222 = scalar_lea.vmem [#allocation5], 256
    %v223 = vld [vmem:[%s222] sm:$0xff]
    %v224 = vld [vmem:[%s222 + $0x8] sm:$0xff]
    %v225 = vld [vmem:[%s222 + $0x10] sm:$0xff]
    %v226 = vld [vmem:[%s222 + $0x18] sm:$0xff]
    %v227 = vld [vmem:[%s222 + $0x20] sm:$0xff]
    %v228 = vld [vmem:[%s222 + $0x28] sm:$0xff]
    %v229 = vld [vmem:[%s222 + $0x30] sm:$0xff]
    %v230 = vld [vmem:[%s222 + $0x38] sm:$0xff]
    %v231 = vld [vmem:[%s222 + $0x40] sm:$0xff]
    %v232 = vld [vmem:[%s222 + $0x48] sm:$0xff]
    %v233 = vld [vmem:[%s222 + $0x50] sm:$0xff]
    %v234 = vld [vmem:[%s222 + $0x58] sm:$0xff]
    %v235 = vld [vmem:[%s222 + $0x60] sm:$0xff]
    %v236 = vld [vmem:[%s222 + $0x68] sm:$0xff]
    %v237 = vld [vmem:[%s222 + $0x70] sm:$0xff]
    %v238 = vld [vmem:[%s222 + $0x78] sm:$0xff]
    %s239 = scalar_lea.vmem %s2, 2
    %v240 = vld [vmem:[%s239] sm:$0x1]
    %v242 = vlaneseq
    %v243 = vshrl.u32 %v242, 7
    %v244 = vsub.s32 0, %v243
    %v245 = vrot.slane %v240, %v244
    %247 = vmatprep.subr.mxu0 0.0
    %248 = vmatpush1.msra.mxu0 %v223
    %249 = vmatprep.subr.mxu0 0.0
    %250 = vmatpush1.msra.mxu0 %v224
    %251 = vmatprep.subr.mxu0 0.0
    %252 = vmatpush1.msra.mxu0 %v225
    %253 = vmatprep.subr.mxu0 0.0
    %254 = vmatpush1.msra.mxu0 %v226
    %255 = vmatprep.subr.mxu0 0.0
    %256 = vmatpush1.msra.mxu0 %v227
    %257 = vmatprep.subr.mxu0 0.0
    %258 = vmatpush1.msra.mxu0 %v228
    %259 = vmatprep.subr.mxu0 0.0
    %260 = vmatpush1.msra.mxu0 %v229
    %261 = vmatprep.subr.mxu0 0.0
    %262 = vmatpush1.msra.mxu0 %v230
    %263 = vmatprep.subr.mxu0 0.0
    %264 = vmatpush1.msra.mxu0 %v231
    %265 = vmatprep.subr.mxu0 0.0
    %266 = vmatpush1.msra.mxu0 %v232
    %267 = vmatprep.subr.mxu0 0.0
    %268 = vmatpush1.msra.mxu0 %v233
    %269 = vmatprep.subr.mxu0 0.0
    %270 = vmatpush1.msra.mxu0 %v234
    %271 = vmatprep.subr.mxu0 0.0
    %272 = vmatpush1.msra.mxu0 %v235
    %273 = vmatprep.subr.mxu0 0.0
    %274 = vmatpush1.msra.mxu0 %v236
    %275 = vmatprep.subr.mxu0 0.0
    %276 = vmatpush1.msra.mxu0 %v237
    %277 = vmatprep.subr.mxu0 0.0
    %278 = vmatpush1.msra.mxu0 %v238
    %279 = vmatprep.subr.mxu0 0.0
    %280 = vmatpush1.msra.mxu0 0.0
    %281 = vmatprep.subr.mxu0 0.0
    %282 = vmatpush1.msra.mxu0 0.0
    %283 = vmatprep.subr.mxu0 0.0
    %284 = vmatpush1.msra.mxu0 0.0
    %285 = vmatprep.subr.mxu0 0.0
    %286 = vmatpush1.msra.mxu0 0.0
    %287 = vmatprep.subr.mxu0 0.0
    %288 = vmatpush1.msra.mxu0 0.0
    %289 = vmatprep.subr.mxu0 0.0
    %290 = vmatpush1.msra.mxu0 0.0
    %291 = vmatprep.subr.mxu0 0.0
    %292 = vmatpush1.msra.mxu0 0.0
    %293 = vmatprep.subr.mxu0 0.0
    %294 = vmatpush1.msra.mxu0 0.0
    %295 = vmatprep.subr.mxu0 0.0
    %296 = vmatpush1.msra.mxu0 0.0
    %297 = vmatprep.subr.mxu0 0.0
    %298 = vmatpush1.msra.mxu0 0.0
    %299 = vmatprep.subr.mxu0 0.0
    %300 = vmatpush1.msra.mxu0 0.0
    %301 = vmatprep.subr.mxu0 0.0
    %302 = vmatpush1.msra.mxu0 0.0
    %303 = vmatprep.subr.mxu0 0.0
    %304 = vmatpush1.msra.mxu0 0.0
    %305 = vmatprep.subr.mxu0 0.0
    %306 = vmatpush1.msra.mxu0 0.0
    %307 = vmatprep.subr.mxu0 0.0
    %308 = vmatpush1.msra.mxu0 0.0
    %309 = vmatprep.subr.mxu0 0.0
    %310 = vmatpush1.msra.mxu0 0.0
    %311 = vmatprep.mubr.f32.mxu0 0.0
    %312 = vmatmul.mubr.f32.gmra.mrb[0].mxu0 %v221
    %v313 = vpop.f32.mrb[0].mxu0
    %v314 = vadd.f32 %v245, %v313
    %v315 = vpop.f32.mrb[0].mxu0
    %316 = vdwg.mxu0
    %vm317 = vcmask 31744
    %v318 = vsel %vm317, %v314, -inf
    %319 = vmax.xlane.f32.xlu0 %v318
    %v320 = vpop.xlane.xlu0 %319
    %322 = vset.pattern.permute.xlu0 4
    %323 = vperm.xlu0 %322, %v314
    %v324 = vpop.permute.xlu0 %323
    %v326 = vadd.f32 %v324, %v314
    %v327 = vsub.f32 %v326, %v320
    %328 = vst [vmem:[#allocation7] sm:$0xff] %v327
    // Predicated region
    $region22: #{tpu_custom_call.1} parent=1 // pred_check
      _
    $region23: #{tpu_custom_call.1} parent=1 // pred_check_branch
      %330 = sbr.rel (0) target = $region25
    $region24: #{tpu_custom_call.1} parent=1 // pred_region
      %s332 = ssub.s32 128, 128
      %333 = vsyncadd [#allocation4], %s332
      %s335 = sshll.u32 [#allocation7], 4
      %s336 = int_to_ptr.vmem [resolvable:$true] %s335
      %338 = dma.vmem_to_hbm [thread:$0]  %s336, 128, %s3, [#allocation4]
    $region25: #{tpu_custom_call.1} parent=1 // pred_fallthru
      _
    // Predicated region
    $region26: #{tpu_custom_call.1} parent=1 // pred_check
      _
    $region27: #{tpu_custom_call.1} parent=1 // pred_check_branch
      %340 = sbr.rel (0) target = $region29
    $region28: #{tpu_custom_call.1} parent=1 // pred_region
      %341 = dma.done [#allocation4], 128
    $region29: #{tpu_custom_call.1} parent=1 // pred_fallthru
      _
    %342 = vsyncpa [#allocation3], 1
    %343 = vsyncpa [#allocation6], 1
    %344 = vsyncpa [#allocation4], 1

</llo_original>
